<compile_context>
chip_gen: v6e
topology: v6e:2x2x1
jax: 0.10.0
libtpu: 0.0.40
codegen_flags: <defaults>
</compile_context>

<pallas_src>
import functools

import jax
import jax.numpy as jnp
from jax.experimental import pallas as pl
from jax.experimental.pallas import tpu as pltpu


_VMEM_LIMIT_BYTES = 48 * 1024 * 1024          # fits v5e/v6e (128 MiB) and v7x (64 MiB)
_TARGET_TILE_BYTES = 4 * 1024 * 1024          # streaming tile size (amortizes ~0.35 us/step)
_SINGLE_PASS_MAX_F32_BYTES = 12 * 1024 * 1024  # slab (f32-equiv) threshold for fused path
_SUBLANE = {4: 8, 2: 16, 1: 32}               # dtype-aware sublane packing


def _round_up(v, m):
    return ((v + m - 1) // m) * m


def _pick_lane_width(n, requested):
    if requested is not None:
        return requested
    for c in (1024, 512, 256, 128):
        if n % c == 0:
            return c
    return 128  # ragged: pad


def _pick_tile_rows(R, sublane, max_rows):
    """Largest divisor of R that is a sublane multiple and <= max_rows,
    preferring one that yields an EVEN tile count (v7x megacore balance)."""
    best_any = None
    best_even = None
    limit = min(R, max_rows)
    for t in range(sublane, limit + 1, sublane):
        if R % t == 0:
            best_any = t
            if (R // t) % 2 == 0:
                best_even = t
    return best_even if best_even is not None else best_any


# ---------------------------- kernels ----------------------------

def _fused_center_kernel(x_ref, o_ref, *, n):
    # Whole slab resident in VMEM: reduce in f32, subtract, round once.
    x = x_ref[...].astype(jnp.float32)
    mean = jnp.sum(x) / n
    o_ref[...] = (x - mean).astype(o_ref.dtype)


def _partial_sum_kernel(x_ref, s_ref):
    # f32 per-column partial sums for this tile -> (1, 1, C) block.
    col_sums = jnp.sum(x_ref[...].astype(jnp.float32), axis=0)
    s_ref[...] = col_sums.reshape(s_ref.shape)


def _subtract_kernel(mean_ref, x_ref, o_ref):
    # mean_ref: (1,) f32 in SMEM. Compute in f32, round once to output dtype.
    x = x_ref[...].astype(jnp.float32)
    o_ref[...] = (x - mean_ref[0]).astype(o_ref.dtype)


# ---------------------------- wrapper ----------------------------

def _centered_layer(x, *, lane_width=None, max_tile_rows=None,
                    single_pass_max_bytes=_SINGLE_PASS_MAX_F32_BYTES):
    orig_shape = x.shape
    orig_dtype = x.dtype
    n = int(x.size)
    if n == 0:
        return x
    itemsize = jnp.dtype(orig_dtype).itemsize
    sublane = _SUBLANE.get(itemsize, 8)

    C = _pick_lane_width(n, lane_width)
    R = (n + C - 1) // C

    # -------- single-pass fast path: slab fits comfortably in VMEM --------
    if R * C * 4 <= single_pass_max_bytes:
        flat = x.reshape(-1)
        pad = R * C - n
        if pad:
            flat = jnp.pad(flat, (0, pad))   # zeros don't change the sum
        x2d = flat.reshape(R, C)

        out2d = pl.pallas_call(
            functools.partial(_fused_center_kernel, n=n),
            out_shape=jax.ShapeDtypeStruct((R, C), orig_dtype),
            in_specs=[pl.BlockSpec(memory_space=pltpu.MemorySpace.VMEM)],
            out_specs=pl.BlockSpec(memory_space=pltpu.MemorySpace.VMEM),
            compiler_params=pltpu.CompilerParams(
                vmem_limit_bytes=_VMEM_LIMIT_BYTES),
            cost_estimate=pl.CostEstimate(
                flops=2 * n, transcendentals=0,
                bytes_accessed=2 * n * itemsize),
        )(x2d)

        out = out2d
        if pad:
            out = out.reshape(-1)[:n]
        return out.reshape(orig_shape)

    # -------- two-pass path: partial sums, then tiled subtract --------
    if max_tile_rows is None:
        max_rows = max(sublane,
                       (_TARGET_TILE_BYTES // (C * itemsize)) // sublane * sublane)
    else:
        max_rows = max(sublane, (max_tile_rows // sublane) * sublane)

    tile_rows = _pick_tile_rows(R, sublane, max_rows)
    if tile_rows is None or tile_rows * 8 < min(R, max_rows):
        # No clean (or only pathologically small) divisor: pad rows instead.
        tile_rows = max(sublane, min(max_rows, _round_up(R, sublane)))
        R_pad = _round_up(R, tile_rows)
    else:
        R_pad = R
    num_tiles = R_pad // tile_rows

    flat = x.reshape(-1)
    pad = R_pad * C - n
    if pad:
        # TODO(synk): for truly ragged N, mask the tail in-kernel instead of
        # materializing a padded copy (extra ~2N HBM bytes on this rare path).
        flat = jnp.pad(flat, (0, pad))       # zeros don't change the sum
    x2d = flat.reshape(R_pad, C)

    # pass 1: per-tile f32 column partial sums
    partials = pl.pallas_call(
        _partial_sum_kernel,
        out_shape=jax.ShapeDtypeStruct((num_tiles, 1, C), jnp.float32),
        grid=(num_tiles,),
        in_specs=[pl.BlockSpec((tile_rows, C), lambda i: (i, 0))],
        out_specs=pl.BlockSpec((1, 1, C), lambda i: (i, 0, 0)),
        compiler_params=pltpu.CompilerParams(
            dimension_semantics=("parallel",),
            vmem_limit_bytes=_VMEM_LIMIT_BYTES),
        cost_estimate=pl.CostEstimate(
            flops=n, transcendentals=0, bytes_accessed=n * itemsize),
    )(x2d)

    # Tiny finish (fused under jit): true divide by the original element count.
    mean = (jnp.sum(partials) / n).astype(jnp.float32).reshape(1)

    # pass 2: tiled elementwise subtract
    out2d = pl.pallas_call(
        _subtract_kernel,
        out_shape=jax.ShapeDtypeStruct((R_pad, C), orig_dtype),
        grid=(num_tiles,),
        in_specs=[
            pl.BlockSpec(memory_space=pltpu.MemorySpace.SMEM),   # (1,) f32 mean
            pl.BlockSpec((tile_rows, C), lambda i: (i, 0)),
        ],
        out_specs=pl.BlockSpec((tile_rows, C), lambda i: (i, 0)),
        compiler_params=pltpu.CompilerParams(
            dimension_semantics=("parallel",),
            vmem_limit_bytes=_VMEM_LIMIT_BYTES),
        cost_estimate=pl.CostEstimate(
            flops=n, transcendentals=0, bytes_accessed=2 * n * itemsize),
    )(mean, x2d)

    out = out2d
    if pad:
        out = out.reshape(-1)[:n]
    return out.reshape(orig_shape)


# Single jitted entry point: pad, kernels, finish, and slice compile together.
centered_layer = jax.jit(
    _centered_layer,
    static_argnames=("lane_width", "max_tile_rows", "single_pass_max_bytes"))


if __name__ == "__main__":
    key = jax.random.PRNGKey(0)
    k1, k2, k3, k4, k5 = jax.random.split(key, 5)

    def _check(x, atol=1e-5, **kw):
        y = jax.block_until_ready(centered_layer(x, **kw))
        ref = x.astype(jnp.float32) - jnp.mean(x.astype(jnp.float32))
        assert y.shape == x.shape and y.dtype == x.dtype
        assert jnp.allclose(y.astype(jnp.float32), ref, atol=atol), \
            "mismatch vs reference"
        return y

    # Small 4-D activation -> single-pass VMEM-resident fused path.
    x1 = jax.random.normal(k1, (2, 4, 16, 16), dtype=jnp.float32)
    y1 = _check(x1)
    assert abs(float(jnp.mean(y1))) < 1e-5, "output mean not ~0"

    # Ragged shape that needs zero padding into the lane-dense slab.
    x2 = jax.random.normal(k2, (3, 5, 7), dtype=jnp.float32)
    _check(x2)

    # Force the two-pass multi-tile pipelined path (small tiles for the test).
    x3 = jax.random.normal(k3, (64, 128), dtype=jnp.float32)
    _check(x3, lane_width=128, max_tile_rows=8, single_pass_max_bytes=0)

    # Two-pass path with default tiling (even tile count for megacore balance).
    x4 = jax.random.normal(k4, (64, 1024), dtype=jnp.float32)
    _check(x4, single_pass_max_bytes=0)

    # bf16 path: f32 accumulation, single f32 subtract, round once to bf16.
    x5 = jax.random.normal(k5, (8, 256), dtype=jnp.bfloat16)
    _check(x5, atol=1e-1)

    print("KERNEL_OK")
</pallas_src>

<mosaic_0001>
module attributes {stable_mosaic.version = 11 : i64} {
  func.func @_fused_center_kernel(%arg0: memref<2x1024xf32, #tpu.memory_space<vmem>>, %arg1: memref<2x1024xf32, #tpu.memory_space<vmem>>) attributes {dimension_semantics = [], scalar_prefetch = 0 : i64, scratch_operands = 0 : i64, tpu.core_type = #tpu.core_type<tc>} {
    %c0 = arith.constant 0 : index
    %c0_0 = arith.constant 0 : index
    %0 = vector.load %arg0[%c0, %c0_0] : memref<2x1024xf32, #tpu.memory_space<vmem>>, vector<2x1024xf32>
    %1 = vector.shape_cast %0 : vector<2x1024xf32> to vector<1x2x1024xf32>
    %cst = arith.constant dense<0.000000e+00> : vector<1xf32>
    %2 = vector.multi_reduction <add>, %1, %cst [1, 2] : vector<1x2x1024xf32> to vector<1xf32>
    %3 = vector.shape_cast %2 : vector<1xf32> to vector<1x1x1xf32>
    %4 = vector.extract %3[0, 0, 0] : f32 from vector<1x1x1xf32>
    %cst_1 = arith.constant 2.048000e+03 : f32
    %5 = arith.divf %4, %cst_1 : f32
    %6 = vector.broadcast %5 : f32 to vector<2x1024xf32>
    %7 = arith.subf %0, %6 : vector<2x1024xf32>
    %c0_2 = arith.constant 0 : index
    %c0_3 = arith.constant 0 : index
    %8 = vector.load %arg1[%c0_2, %c0_3] : memref<2x1024xf32, #tpu.memory_space<vmem>>, vector<2x1024xf32>
    tpu.vector_store %arg1[%c0_2, %c0_3], %7 {strides = array<i32>} : memref<2x1024xf32, #tpu.memory_space<vmem>>, vector<2x1024xf32>,
    return
  }
}

</mosaic_0001>

<llo_original>
// kernel: _centered_layer.1
$region0: #{_centered_layer.1}
  #allocation0 [shape = 'u32[]', space=smem, size = 0x4, offset = 0x4, fixed_abs, tag = 'smem constant byte address 0x4 - core index']
  #allocation1 [shape = 'u32[144,128]{1,0:T(1,128)}', space=vmem, size = 0x12000, scoped, tag = 'internal scratch']
  %s0 = inlined_call_operand.vmem [shape: f32[2,1024], index: 0, kind: input, shape index: {}]
  %s1 = inlined_call_operand.vmem [shape: f32[2,1024], index: 1, kind: output, shape index: {}]
  %s2 = sld [smem:[#allocation0]]
  $region14: #{_centered_layer.1} parent=0
    _
  %s4 = ssub.s32 1, %s2
  %s5 = scalar_select 0, %s4, %s2
  // Predicated region
  $region2: #{_centered_layer.1} parent=0 // pred_check
    _
  $region3: #{_centered_layer.1} parent=0 // pred_check_branch
    %7 = sbr.rel (0) target = $region5
  $region4: #{_centered_layer.1} parent=0 // pred_region
    _
  $region5: #{_centered_layer.1} parent=0 // pred_fallthru
    _
  %v8 = vld [vmem:[%s0] sm:$0xff]
  %v9 = vld [vmem:[%s0 + $0x8] sm:$0xff]
  %v12 = vcombine.high %v8, %v8
  %v14 = vunpack.c.l.s4 1983009808
  %v15 = vunpack.c.0.s8 %v14
  %v16 = vlaneseq
  %v17 = vshrl.u32 %v16, 7
  %v18 = vsub.s32 %v15, %v17
  %v19 = vrot.slane %v8, %v18
  %v21 = vunpack.c.l.s4 1983009808
  %v22 = vunpack.c.0.s8 %v21
  %v23 = vlaneseq
  %v24 = vshrl.u32 %v23, 7
  %v25 = vsub.s32 %v22, %v24
  %v26 = vrot.slane %v12, %v25
  %v27 = vcombine.high %v19, %v19
  %v28 = vcombine.high %v26, %v26
  %v29 = vcombine.high %v9, %v9
  %v31 = vunpack.c.l.s4 1983009808
  %v32 = vunpack.c.0.s8 %v31
  %v33 = vlaneseq
  %v34 = vshrl.u32 %v33, 7
  %v35 = vsub.s32 %v32, %v34
  %v36 = vrot.slane %v9, %v35
  %v38 = vunpack.c.l.s4 1983009808
  %v39 = vunpack.c.0.s8 %v38
  %v40 = vlaneseq
  %v41 = vshrl.u32 %v40, 7
  %v42 = vsub.s32 %v39, %v41
  %v43 = vrot.slane %v29, %v42
  %v44 = vcombine.high %v36, %v36
  %v45 = vcombine.high %v43, %v43
  %vm54 = vcmask 1041408
  %v55 = vsel %vm54, %v19, 0.0
  %v56 = vsel %vm54, %v27, 0.0
  %v57 = vadd.f32 %v55, %v56
  %v58 = vsel %vm54, %v26, 0.0
  %v59 = vadd.f32 %v57, %v58
  %v60 = vsel %vm54, %v28, 0.0
  %v61 = vadd.f32 %v59, %v60
  %v62 = vsel %vm54, %v36, 0.0
  %v63 = vadd.f32 %v61, %v62
  %v64 = vsel %vm54, %v44, 0.0
  %v65 = vadd.f32 %v63, %v64
  %v66 = vsel %vm54, %v43, 0.0
  %v67 = vadd.f32 %v65, %v66
  %v68 = vsel %vm54, %v45, 0.0
  %v69 = vadd.f32 %v67, %v68
  %70 = vadd.xlane.f32.xlu0 %v69
  %v71 = vpop.xlane.xlu0 %70
  %v72 = vrot.slane %v71, 4
  %v73 = vadd.f32 %v71, %v72
  %v74 = vrot.slane %v73, 2
  %v75 = vadd.f32 %v73, %v74
  %v76 = vrot.slane %v75, 1
  %v77 = vadd.f32 %v75, %v76
  %s78 = vtos %v77
  %v79 = vrcp.pop 2048.0
  %s80 = vtos %v79
  %s81 = smul.f32 %s78, %s80
  %v82 = vstv %s81
  %v83 = vsub.f32 %v8, %v82
  %v84 = vsub.f32 %v9, %v82
  %85 = vst [vmem:[%s1] sm:$0xff] %v83
  %86 = vst [vmem:[%s1 + $0x8] sm:$0xff] %v84
  // Predicated region
  $region6: #{_centered_layer.1} parent=0 // pred_check
    _
  $region7: #{_centered_layer.1} parent=0 // pred_check_branch
    %88 = sbr.rel (0) target = $region9
  $region8: #{_centered_layer.1} parent=0 // pred_region
    _
  $region9: #{_centered_layer.1} parent=0 // pred_fallthru
    _
  // Predicated region
  $region10: #{_centered_layer.1} parent=0 // pred_check
    _
  $region11: #{_centered_layer.1} parent=0 // pred_check_branch
    %90 = sbr.rel (0) target = $region13
  $region12: #{_centered_layer.1} parent=0 // pred_region
    _
  $region13: #{_centered_layer.1} parent=0 // pred_fallthru
    _

</llo_original>
